<compile_context>
chip_gen: v5e
topology: v5e:2x2
jax: 0.10.0
libtpu: 0.0.40
codegen_flags: <defaults>
</compile_context>

<pallas_src>
import functools

import jax
import jax.numpy as jnp
from jax.experimental import pallas as pl
from jax.experimental.pallas import tpu as pltpu


def _round_up(n, m):
    return ((n + m - 1) // m) * m


def _sage_mlp_kernel(x_ref, w_ref, b_ref, o_ref, *, normalize):
    # x_ref : (tm, Cin)    bf16 tile of node features (pipelined over rows)
    # w_ref : (Cin, Cout)  bf16 fused weight (W_l + W_r)^T, resident in VMEM
    # b_ref : (1, Cout)    f32 bias, resident in VMEM
    # o_ref : (tm, Cout)   f32 output tile
    out = jnp.dot(x_ref[...], w_ref[...], preferred_element_type=jnp.float32)
    out = out + b_ref[...]                                 # broadcast over rows
    if normalize:
        # F.normalize(out, p=2, dim=-1) == out / max(||out||_2, eps)
        norm = jnp.sqrt(jnp.sum(out * out, axis=-1, keepdims=True))
        out = out * pl.reciprocal(jnp.maximum(norm, 1e-12), approx=True)
    o_ref[...] = out.astype(o_ref.dtype)


def sage_conv_peer_mlp(x, w_l, b_l, w_r=None, *, normalize=False,
                       root_weight=True, tm=256, compute_dtype=jnp.bfloat16):
    """SAGEConv_PeerMLP forward.

    x   : [N, Cin]
    w_l : [Cout, Cin]   (PyTorch Linear layout)
    b_l : [Cout] or None
    w_r : [Cout, Cin] or None (used when root_weight=True)
    Returns f32 [N, Cout].
    """
    N, Cin = x.shape
    Cout = w_l.shape[0]

    # Fold the two linear layers into a single matmul: x @ (W_l + W_r).T + b_l.
    w = jnp.asarray(w_l, jnp.float32)
    if root_weight and w_r is not None:
        w = w + jnp.asarray(w_r, jnp.float32)
    w_t = w.T.astype(compute_dtype)                        # [Cin, Cout]
    if b_l is None:
        b = jnp.zeros((1, Cout), jnp.float32)
    else:
        b = jnp.asarray(b_l, jnp.float32).reshape(1, Cout)

    # Row tile: multiple of 8 (f32 sublane); never bigger than the padded N.
    tm = max(8, min(_round_up(tm, 8), _round_up(N, 8)))
    n_pad = _round_up(N, tm)

    x_c = x.astype(compute_dtype)
    if n_pad != N:
        x_c = jnp.pad(x_c, ((0, n_pad - N), (0, 0)))

    kernel = functools.partial(_sage_mlp_kernel, normalize=normalize)

    out = pl.pallas_call(
        kernel,
        out_shape=jax.ShapeDtypeStruct((n_pad, Cout), jnp.float32),
        grid_spec=pltpu.PrefetchScalarGridSpec(
            num_scalar_prefetch=0,
            grid=(n_pad // tm,),
            in_specs=[
                pl.BlockSpec((tm, Cin), lambda i: (i, 0)),     # x tile (pipelined)
                pl.BlockSpec((Cin, Cout), lambda i: (0, 0)),   # fused W (resident)
                pl.BlockSpec((1, Cout), lambda i: (0, 0)),     # bias (resident)
            ],
            out_specs=pl.BlockSpec((tm, Cout), lambda i: (i, 0)),
        ),
        compiler_params=pltpu.CompilerParams(
            dimension_semantics=("parallel",)),
    )(x_c, w_t, b)

    return out[:N] if n_pad != N else out


def _torch_linear_init(key, out_features, in_features):
    """Deterministic Kaiming-uniform-style init matching torch.nn.Linear."""
    kw, kb = jax.random.split(key)
    bound_w = (1.0 / in_features) ** 0.5 * (3.0 ** 0.5)    # kaiming_uniform(a=sqrt(5))
    w = jax.random.uniform(kw, (out_features, in_features),
                           minval=-bound_w, maxval=bound_w, dtype=jnp.float32)
    bound_b = (1.0 / in_features) ** 0.5
    b = jax.random.uniform(kb, (out_features,),
                           minval=-bound_b, maxval=bound_b, dtype=jnp.float32)
    return w, b


if __name__ == "__main__":
    key = jax.random.PRNGKey(0)
    k_x, k_l, k_r = jax.random.split(key, 3)

    # N deliberately not a multiple of the tile to exercise the padding path;
    # with tm=256 the grid has 2 steps (keeps both v7x TensorCores busy).
    N, Cin, Cout = 500, 32, 32
    x = jax.random.normal(k_x, (N, Cin), dtype=jnp.float32)

    w_l, b_l = _torch_linear_init(k_l, Cout, Cin)   # lin_l (with bias)
    w_r, _ = _torch_linear_init(k_r, Cout, Cin)     # lin_r (bias=False)

    # --- default forward (normalize=False) ---
    out = sage_conv_peer_mlp(x, w_l, b_l, w_r, normalize=False, tm=256)
    out = jax.block_until_ready(out)
    assert out.shape == (N, Cout)

    # Tight check against a bf16-input / f32-accumulate reference (mirrors kernel math).
    x_bf = x.astype(jnp.bfloat16).astype(jnp.float32)
    w_bf = (w_l + w_r).T.astype(jnp.bfloat16).astype(jnp.float32)
    ref_bf = x_bf @ w_bf + b_l
    assert jnp.max(jnp.abs(out - ref_bf)) < 2e-3

    # Loose check against the exact f32 PyTorch-style reference.
    ref = x @ w_l.T + b_l + x @ w_r.T
    assert jnp.max(jnp.abs(out - ref)) < 5e-2

    # --- normalize=True path ---
    out_n = sage_conv_peer_mlp(x, w_l, b_l, w_r, normalize=True, tm=256)
    out_n = jax.block_until_ready(out_n)
    ref_n = ref / jnp.maximum(jnp.linalg.norm(ref, axis=-1, keepdims=True), 1e-12)
    assert jnp.max(jnp.abs(out_n - ref_n)) < 5e-2

    print("KERNEL_OK")
</pallas_src>

<mosaic_0001>
module attributes {stable_mosaic.version = 11 : i64} {
  func.func @_sage_mlp_kernel(%arg0: i32, %arg1: memref<256x32xbf16, #tpu.memory_space<vmem>>, %arg2: memref<32x32xbf16, #tpu.memory_space<vmem>>, %arg3: memref<1x32xf32, #tpu.memory_space<vmem>>, %arg4: memref<256x32xf32, #tpu.memory_space<vmem>>) attributes {dimension_semantics = [#tpu.dimension_semantics<parallel>], iteration_bounds = array<i64: 2>, scalar_prefetch = 0 : i64, scratch_operands = 0 : i64, tpu.core_type = #tpu.core_type<tc>, window_params = [{transform_indices = @transform_0, window_bounds = array<i64: 256, 32>}, {pipeline_mode = #tpu.pipeline_mode<synchronous>, transform_indices = @transform_1, window_bounds = array<i64: 32, 32>}, {pipeline_mode = #tpu.pipeline_mode<synchronous>, transform_indices = @transform_2, window_bounds = array<i64: 1, 32>}, {transform_indices = @transform_3, window_bounds = array<i64: 256, 32>}]} {
    %c0 = arith.constant 0 : index
    %c0_0 = arith.constant 0 : index
    %0 = vector.load %arg1[%c0, %c0_0] : memref<256x32xbf16, #tpu.memory_space<vmem>>, vector<256x32xbf16>
    %c0_1 = arith.constant 0 : index
    %c0_2 = arith.constant 0 : index
    %1 = vector.load %arg2[%c0_1, %c0_2] : memref<32x32xbf16, #tpu.memory_space<vmem>>, vector<32x32xbf16>
    %cst = arith.constant dense<0.000000e+00> : vector<256x32xf32>
    %2 = tpu.matmul %0, %1, %cst {dimension_numbers = #tpu.dot_dimension_numbers<[1], [0], [0], [1], [0, 0, 1, 1], [], []>} : vector<256x32xbf16>, vector<32x32xbf16>, vector<256x32xf32> -> vector<256x32xf32>
    %c0_3 = arith.constant 0 : index
    %c0_4 = arith.constant 0 : index
    %3 = vector.load %arg3[%c0_3, %c0_4] : memref<1x32xf32, #tpu.memory_space<vmem>>, vector<1x32xf32>
    %4 = vector.broadcast %3 : vector<1x32xf32> to vector<256x32xf32>
    %5 = arith.addf %2, %4 : vector<256x32xf32>
    %c0_5 = arith.constant 0 : index
    %c0_6 = arith.constant 0 : index
    %6 = vector.load %arg4[%c0_5, %c0_6] : memref<256x32xf32, #tpu.memory_space<vmem>>, vector<256x32xf32>
    tpu.vector_store %arg4[%c0_5, %c0_6], %5 {strides = array<i32>} : memref<256x32xf32, #tpu.memory_space<vmem>>, vector<256x32xf32>,
    return
  }
  func.func @transform_0(%arg0: i32) -> (i32, i32) {
    %c0_i32 = arith.constant 0 : i32
    %c0_i32_0 = arith.constant 0 : i32
    return %arg0, %c0_i32 : i32, i32
  }
  func.func @transform_1(%arg0: i32) -> (i32, i32) {
    %c0_i32 = arith.constant 0 : i32
    %c0_i32_0 = arith.constant 0 : i32
    %c0_i32_1 = arith.constant 0 : i32
    return %c0_i32, %c0_i32_0 : i32, i32
  }
  func.func @transform_2(%arg0: i32) -> (i32, i32) {
    %c0_i32 = arith.constant 0 : i32
    %c0_i32_0 = arith.constant 0 : i32
    %c0_i32_1 = arith.constant 0 : i32
    return %c0_i32, %c0_i32_0 : i32, i32
  }
  func.func @transform_3(%arg0: i32) -> (i32, i32) {
    %c0_i32 = arith.constant 0 : i32
    %c0_i32_0 = arith.constant 0 : i32
    return %arg0, %c0_i32 : i32, i32
  }
}

</mosaic_0001>

<llo_original>
// kernel: tpu_custom_call.1
$region0: #{tpu_custom_call.1}
  #allocation0 [shape = 'u32[]', space=smem, size = 0x4, offset = 0x4, fixed_abs, tag = 'smem constant byte address 0x4 - core index']
  #allocation1 [shape = 'u32[72,128]{1,0:T(1,128)}', space=vmem, size = 0x9000, scoped, tag = 'internal scratch']
  %s0 = inlined_call_operand.vmem [shape: bf16[512,32], index: 0, kind: input, shape index: {}]
  %s1 = inlined_call_operand.vmem [shape: bf16[32,32], index: 1, kind: input, shape index: {}]
  %s2 = inlined_call_operand.vmem [shape: f32[1,32], index: 2, kind: input, shape index: {}]
  %s3 = inlined_call_operand.vmem [shape: f32[512,32], index: 3, kind: output, shape index: {}]
  %s4 = sld [smem:[#allocation0]]
  $region45: #{tpu_custom_call.1} parent=0
    _
  %s6 = ssub.s32 1, %s4
  %s7 = scalar_select 0, %s6, %s4
  loop: start=0, step=1, limit=4
  $region2: #{tpu_custom_call.1} parent=0 // loop_pre_header
    _
  $region3: #{tpu_custom_call.1} parent=0 // loop_header
    %s9 = sphi 0, %s13
    %p10 = scmp.ge.s32.totalorder %s9, 4
    %s19 = sphi 0, %s21
    %s22 = sphi 0, %s19
    %s23 = sphi 0, %s22
    %s39 = sphi 0, %s23
    %s43 = sphi 0, %s43
    %s45 = sphi 0, %s43
    %s46 = sphi 0, %s45
    %s60 = sphi 0, %s46
    %s64 = sphi 0, %s64
    %s66 = sphi 0, %s64
    %s67 = sphi 0, %s66
    %s81 = sphi 0, %s67
    %s87 = sphi 0, %s89
    %s90 = sphi 0, %s87
    %s91 = sphi 0, %s90
    %s107 = sphi 0, %s91
  $region4: #{tpu_custom_call.1} parent=0 // loop_header_branch
    %12 = sbr.rel (%p10) target = $region8
  $region5: #{tpu_custom_call.1} parent=0 // loop_body
    %s14 = ssub.s32 %s9, 1
    %s15 = ssub.s32 %s9, 2
    %s16 = sadd.s32 %s9, 1
    %s17 = ssub.s32 %s9, %s16
    %p18 = scmp.eq.s32.totalorder %s17, 0
    %s20 = sadd.s32 %s19, 1
    %s21 = scalar_select %p18, %s19, %s20
    %p24 = pneg %p18
    %p25 = scmp.eq.s32.totalorder %s9, 1
    %p26 = por %p24, %p25
    %p27 = scmp.ne.s32.totalorder %s19, %s22
    %p28 = scmp.eq.s32.totalorder %s9, 0
    %p29 = por %p27, %p28
    %p30 = scmp.ne.s32.totalorder %s19, %s22
    %p31 = scmp.eq.s32.totalorder %s14, 1
    %p32 = por %p30, %p31
    %p33 = scmp.ne.s32.totalorder %s22, %s23
    %p34 = scmp.eq.s32.totalorder %s14, 0
    %p35 = por %p33, %p34
    %p36 = scmp.ne.s32.totalorder %s22, %s23
    %p37 = scmp.eq.s32.totalorder %s15, 1
    %p38 = por %p36, %p37
    %p40 = scmp.ne.s32.totalorder %s23, %s39
    %p41 = scmp.eq.s32.totalorder %s15, 0
    %p42 = por %p40, %p41
    %s44 = sadd.s32 %s43, 1
    %p47 = scmp.eq.s32.totalorder %s9, 1
    %p48 = scmp.ne.s32.totalorder %s43, %s45
    %p49 = scmp.eq.s32.totalorder %s9, 0
    %p50 = por %p48, %p49
    %p51 = scmp.ne.s32.totalorder %s43, %s45
    %p52 = scmp.eq.s32.totalorder %s14, 1
    %p53 = por %p51, %p52
    %p54 = scmp.ne.s32.totalorder %s45, %s46
    %p55 = scmp.eq.s32.totalorder %s14, 0
    %p56 = por %p54, %p55
    %p57 = scmp.ne.s32.totalorder %s45, %s46
    %p58 = scmp.eq.s32.totalorder %s15, 1
    %p59 = por %p57, %p58
    %p61 = scmp.ne.s32.totalorder %s46, %s60
    %p62 = scmp.eq.s32.totalorder %s15, 0
    %p63 = por %p61, %p62
    %s65 = sadd.s32 %s64, 1
    %p68 = scmp.eq.s32.totalorder %s9, 1
    %p69 = scmp.ne.s32.totalorder %s64, %s66
    %p70 = scmp.eq.s32.totalorder %s9, 0
    %p71 = por %p69, %p70
    %p72 = scmp.ne.s32.totalorder %s64, %s66
    %p73 = scmp.eq.s32.totalorder %s14, 1
    %p74 = por %p72, %p73
    %p75 = scmp.ne.s32.totalorder %s66, %s67
    %p76 = scmp.eq.s32.totalorder %s14, 0
    %p77 = por %p75, %p76
    %p78 = scmp.ne.s32.totalorder %s66, %s67
    %p79 = scmp.eq.s32.totalorder %s15, 1
    %p80 = por %p78, %p79
    %p82 = scmp.ne.s32.totalorder %s67, %s81
    %p83 = scmp.eq.s32.totalorder %s15, 0
    %p84 = por %p82, %p83
    %s85 = ssub.s32 %s9, %s16
    %p86 = scmp.eq.s32.totalorder %s85, 0
    %s88 = sadd.s32 %s87, 1
    %s89 = scalar_select %p86, %s87, %s88
    %p92 = pneg %p86
    %p93 = scmp.eq.s32.totalorder %s9, 1
    %p94 = por %p92, %p93
    %p95 = scmp.ne.s32.totalorder %s87, %s90
    %p96 = scmp.eq.s32.totalorder %s9, 0
    %p97 = por %p95, %p96
    %p98 = scmp.ne.s32.totalorder %s87, %s90
    %p99 = scmp.eq.s32.totalorder %s14, 1
    %p100 = por %p98, %p99
    %p101 = scmp.ne.s32.totalorder %s90, %s91
    %p102 = scmp.eq.s32.totalorder %s14, 0
    %p103 = por %p101, %p102
    %p104 = scmp.ne.s32.totalorder %s90, %s91
    %p105 = scmp.eq.s32.totalorder %s15, 1
    %p106 = por %p104, %p105
    %p108 = scmp.ne.s32.totalorder %s91, %s107
    %p109 = scmp.eq.s32.totalorder %s15, 0
    %p110 = por %p108, %p109
    %p111 = scmp.le.s32.totalorder 1, %s9
    %p112 = scmp.lt.s32.totalorder %s9, 3
    %p113 = pnand %p111, %p112
    %p114 = pneg %p113
    // Predicated region
    $region9: #{tpu_custom_call.1} parent=5 // pred_check
      _
    $region10: #{tpu_custom_call.1} parent=5 // pred_check_branch
      %116 = sbr.rel (%p113) target = $region12
    $region11: #{tpu_custom_call.1} parent=5 // pred_region
      %s117 = ssub.s32 %s9, 1
      // Predicated region
      $region13: #{tpu_custom_call.1} parent=11 // pred_check
        %p118 = pneg %p56
      $region14: #{tpu_custom_call.1} parent=11 // pred_check_branch
        %120 = sbr.rel (%p118) target = $region16
      $region15: #{tpu_custom_call.1} parent=11 // pred_region
        _
      $region16: #{tpu_custom_call.1} parent=11 // pred_fallthru
        _
      // Predicated region
      $region17: #{tpu_custom_call.1} parent=11 // pred_check
        %p121 = pneg %p77
      $region18: #{tpu_custom_call.1} parent=11 // pred_check_branch
        %123 = sbr.rel (%p121) target = $region20
      $region19: #{tpu_custom_call.1} parent=11 // pred_region
        _
      $region20: #{tpu_custom_call.1} parent=11 // pred_fallthru
        _
    $region12: #{tpu_custom_call.1} parent=5 // pred_fallthru
      _
    %p124 = scmp.lt.s32.totalorder %s9, 2
    // Predicated region
    $region21: #{tpu_custom_call.1} parent=5 // pred_check
      %p125 = pneg %p124
    $region22: #{tpu_custom_call.1} parent=5 // pred_check_branch
      %127 = sbr.rel (%p125) target = $region24
    $region23: #{tpu_custom_call.1} parent=5 // pred_region
      // Predicated region
      $region25: #{tpu_custom_call.1} parent=23 // pred_check
        %p128 = pneg %p29
      $region26: #{tpu_custom_call.1} parent=23 // pred_check_branch
        %130 = sbr.rel (%p128) target = $region28
      $region27: #{tpu_custom_call.1} parent=23 // pred_region
        %s131 = smul.u32 32, %s9
        %p132 = scmp.lt.s32.totalorder %s131, 63
        %s133 = scalar_select %p132, %s131, 63
        %s134 = smul.addr %s133, 4
        %s135 = scalar_lea.vmem %s0, %s134
        %s136 = smul.u32 32, %s9
      $region28: #{tpu_custom_call.1} parent=23 // pred_fallthru
        _
    $region24: #{tpu_custom_call.1} parent=5 // pred_fallthru
      _
    %p137 = scmp.le.s32.totalorder 1, %s9
    %p138 = scmp.lt.s32.totalorder %s9, 3
    %p139 = pnand %p137, %p138
    %p140 = pneg %p139
    // Predicated region
    $region29: #{tpu_custom_call.1} parent=5 // pred_check
      _
    $region30: #{tpu_custom_call.1} parent=5 // pred_check_branch
      %142 = sbr.rel (%p139) target = $region32
    $region31: #{tpu_custom_call.1} parent=5 // pred_region
      %s143 = ssub.s32 %s9, 1
      %s144 = smul.u32 32, %s14
      %p145 = scmp.lt.s32.totalorder %s144, 63
      %s146 = scalar_select %p145, %s144, 63
      %s147 = smul.addr %s146, 4
      %s148 = scalar_lea.vmem %s0, %s147
      %p149 = pneg %p35
      %p150 = pneg %p32
      %p151 = pneg %p56
      %p152 = pneg %p53
      %p153 = pneg %p77
      %p154 = pneg %p74
      %p155 = pneg %p103
      %p156 = pneg %p100
      %s157 = smul.u32 32, %s14
      %p158 = scmp.lt.s32.totalorder %s157, 63
      %s159 = scalar_select %p158, %s157, 63
      %s160 = smul.addr %s159, 8
      %s161 = scalar_lea.vmem %s3, %s160
      %s162 = smul.u32 32, %s14
      %p163 = scmp.lt.s32.totalorder %s162, 63
      %s164 = scalar_select %p163, %s162, 63
      %s165 = smul.addr %s164, 4
      %s166 = scalar_lea.vmem %s0, %s165
      %s167 = smul.u32 32, %s14
      %s168 = smul.u32 32, %s14
      %p169 = scmp.lt.s32.totalorder %s168, 63
      %s170 = scalar_select %p169, %s168, 63
      %s171 = smul.addr %s170, 8
      %s172 = scalar_lea.vmem %s3, %s171
      %s173 = smul.u32 32, %s14
      %v175 = vld [vmem:[%s166] sm:$0xf]
      %v176 = vld [vmem:[%s166 + $0x4] sm:$0xf]
      %v177 = vld [vmem:[%s166 + $0x8] sm:$0xf]
      %v178 = vld [vmem:[%s166 + $0xc] sm:$0xf]
      %v179 = vld [vmem:[%s166 + $0x10] sm:$0xf]
      %v180 = vld [vmem:[%s166 + $0x14] sm:$0xf]
      %v181 = vld [vmem:[%s166 + $0x18] sm:$0xf]
      %v182 = vld [vmem:[%s166 + $0x1c] sm:$0xf]
      %v183 = vld [vmem:[%s166 + $0x20] sm:$0xf]
      %v184 = vld [vmem:[%s166 + $0x24] sm:$0xf]
      %v185 = vld [vmem:[%s166 + $0x28] sm:$0xf]
      %v186 = vld [vmem:[%s166 + $0x2c] sm:$0xf]
      %v187 = vld [vmem:[%s166 + $0x30] sm:$0xf]
      %v188 = vld [vmem:[%s166 + $0x34] sm:$0xf]
      %v189 = vld [vmem:[%s166 + $0x38] sm:$0xf]
      %v190 = vld [vmem:[%s166 + $0x3c] sm:$0xf]
      %v191 = vld [vmem:[%s166 + $0x40] sm:$0xf]
      %v192 = vld [vmem:[%s166 + $0x44] sm:$0xf]
      %v193 = vld [vmem:[%s166 + $0x48] sm:$0xf]
      %v194 = vld [vmem:[%s166 + $0x4c] sm:$0xf]
      %v195 = vld [vmem:[%s166 + $0x50] sm:$0xf]
      %v196 = vld [vmem:[%s166 + $0x54] sm:$0xf]
      %v197 = vld [vmem:[%s166 + $0x58] sm:$0xf]
      %v198 = vld [vmem:[%s166 + $0x5c] sm:$0xf]
      %v199 = vld [vmem:[%s166 + $0x60] sm:$0xf]
      %v200 = vld [vmem:[%s166 + $0x64] sm:$0xf]
      %v201 = vld [vmem:[%s166 + $0x68] sm:$0xf]
      %v202 = vld [vmem:[%s166 + $0x6c] sm:$0xf]
      %v203 = vld [vmem:[%s166 + $0x70] sm:$0xf]
      %v204 = vld [vmem:[%s166 + $0x74] sm:$0xf]
      %v205 = vld [vmem:[%s166 + $0x78] sm:$0xf]
      %v206 = vld [vmem:[%s166 + $0x7c] sm:$0xf]
      %v207 = vld [vmem:[%s1] sm:$0xf]
      %v208 = vld [vmem:[%s1 + $0x4] sm:$0xf]
      %v209 = vld [vmem:[%s1 + $0x8] sm:$0xf]
      %v210 = vld [vmem:[%s1 + $0xc] sm:$0xf]
      %v211 = vld [vmem:[%s2] sm:$0x1]
      %v213 = vperm.slane %v211, 0
      %v247 = vunpack.c.l.b16 %v175
      %v248 = vunpack.c.l.b16 %v176
      %v249 = vunpack.c.l.b16 %v177
      %v250 = vunpack.c.l.b16 %v178
      %v251 = vunpack.c.l.b16 %v179
      %v252 = vunpack.c.l.b16 %v180
      %v253 = vunpack.c.l.b16 %v181
      %v254 = vunpack.c.l.b16 %v182
      %v255 = vunpack.c.l.b16 %v183
      %v256 = vunpack.c.l.b16 %v184
      %v257 = vunpack.c.l.b16 %v185
      %v258 = vunpack.c.l.b16 %v186
      %v259 = vunpack.c.l.b16 %v187
      %v260 = vunpack.c.l.b16 %v188
      %v261 = vunpack.c.l.b16 %v189
      %v262 = vunpack.c.l.b16 %v190
      %v263 = vunpack.c.l.b16 %v191
      %v264 = vunpack.c.l.b16 %v192
      %v265 = vunpack.c.l.b16 %v193
      %v266 = vunpack.c.l.b16 %v194
      %v267 = vunpack.c.l.b16 %v195
      %v268 = vunpack.c.l.b16 %v196
      %v269 = vunpack.c.l.b16 %v197
      %v270 = vunpack.c.l.b16 %v198
      %v271 = vunpack.c.l.b16 %v199
      %v272 = vunpack.c.l.b16 %v200
      %v273 = vunpack.c.l.b16 %v201
      %v274 = vunpack.c.l.b16 %v202
      %v275 = vunpack.c.l.b16 %v203
      %v276 = vunpack.c.l.b16 %v204
      %v277 = vunpack.c.l.b16 %v205
      %v278 = vunpack.c.l.b16 %v206
      %v279 = vpack.c.b16 %v248, %v247
      %v280 = vpack.c.b16 %v250, %v249
      %v281 = vpack.c.b16 %v252, %v251
      %v282 = vpack.c.b16 %v254, %v253
      %v283 = vpack.c.b16 %v256, %v255
      %v284 = vpack.c.b16 %v258, %v257
      %v285 = vpack.c.b16 %v260, %v259
      %v286 = vpack.c.b16 %v262, %v261
      %v287 = vpack.c.b16 %v264, %v263
      %v288 = vpack.c.b16 %v266, %v265
      %v289 = vpack.c.b16 %v268, %v267
      %v290 = vpack.c.b16 %v270, %v269
      %v291 = vpack.c.b16 %v272, %v271
      %v292 = vpack.c.b16 %v274, %v273
      %v293 = vpack.c.b16 %v276, %v275
      %v294 = vpack.c.b16 %v278, %v277
      %v299 = vunpack.c.l.b16 %v207
      %v300 = vunpack.c.l.b16 %v208
      %v301 = vunpack.c.l.b16 %v209
      %v302 = vunpack.c.l.b16 %v210
      %v303 = vpack.c.b16 %v300, %v299
      %v304 = vpack.c.b16 %v302, %v301
      %vm307 = vcmask 261120
      %v309 = vsel %vm307, %v279, 0
      %v312 = vsel %vm307, %v280, 0
      %v315 = vsel %vm307, %v281, 0
      %v318 = vsel %vm307, %v282, 0
      %v321 = vsel %vm307, %v283, 0
      %v324 = vsel %vm307, %v284, 0
      %v327 = vsel %vm307, %v285, 0
      %v330 = vsel %vm307, %v286, 0
      %v333 = vsel %vm307, %v287, 0
      %v336 = vsel %vm307, %v288, 0
      %v339 = vsel %vm307, %v289, 0
      %v342 = vsel %vm307, %v290, 0
      %v345 = vsel %vm307, %v291, 0
      %v348 = vsel %vm307, %v292, 0
      %v351 = vsel %vm307, %v293, 0
      %v354 = vsel %vm307, %v294, 0
      %356 = vmatpush.bf16.msra.mxu0 0
      %357 = vmatpush.bf16.msra.mxu0 0
      %358 = vmatpush.bf16.msra.mxu0 0
      %359 = vmatpush.bf16.msra.mxu0 0
      %360 = vmatpush.bf16.msra.mxu0 0
      %361 = vmatpush.bf16.msra.mxu0 0
      %362 = vmatpush.bf16.msra.mxu0 %v304
      %363 = vmatpush.bf16.msra.mxu0 %v303
      %364 = vmatmul.bf16.gmra.mxu0 %v309
      %v365 = vpop.f32.mrf.mxu0
      %v366 = vadd.f32 %v213, %v365
      %v367 = vpop.f32.mrf.mxu0
      %v368 = vadd.f32 %v213, %v367
      %369 = vmatmul.bf16.gmra.mxu0 %v312
      %v370 = vpop.f32.mrf.mxu0
      %v371 = vadd.f32 %v213, %v370
      %v372 = vpop.f32.mrf.mxu0
      %v373 = vadd.f32 %v213, %v372
      %374 = vmatmul.bf16.gmra.mxu0 %v315
      %v375 = vpop.f32.mrf.mxu0
      %v376 = vadd.f32 %v213, %v375
      %v377 = vpop.f32.mrf.mxu0
      %v378 = vadd.f32 %v213, %v377
      %379 = vmatmul.bf16.gmra.mxu0 %v318
      %v380 = vpop.f32.mrf.mxu0
      %v381 = vadd.f32 %v213, %v380
      %v382 = vpop.f32.mrf.mxu0
      %v383 = vadd.f32 %v213, %v382
      %384 = vmatmul.bf16.gmra.mxu0 %v321
      %v385 = vpop.f32.mrf.mxu0
      %v386 = vadd.f32 %v213, %v385
      %v387 = vpop.f32.mrf.mxu0
      %v388 = vadd.f32 %v213, %v387
      %389 = vmatmul.bf16.gmra.mxu0 %v324
      %v390 = vpop.f32.mrf.mxu0
      %v391 = vadd.f32 %v213, %v390
      %v392 = vpop.f32.mrf.mxu0
      %v393 = vadd.f32 %v213, %v392
      %394 = vmatmul.bf16.gmra.mxu0 %v327
      %v395 = vpop.f32.mrf.mxu0
      %v396 = vadd.f32 %v213, %v395
      %v397 = vpop.f32.mrf.mxu0
      %v398 = vadd.f32 %v213, %v397
      %399 = vmatmul.bf16.gmra.mxu0 %v330
      %v400 = vpop.f32.mrf.mxu0
      %v401 = vadd.f32 %v213, %v400
      %v402 = vpop.f32.mrf.mxu0
      %v403 = vadd.f32 %v213, %v402
      %404 = vmatmul.bf16.gmra.mxu0 %v333
      %v405 = vpop.f32.mrf.mxu0
      %v406 = vadd.f32 %v213, %v405
      %v407 = vpop.f32.mrf.mxu0
      %v408 = vadd.f32 %v213, %v407
      %409 = vmatmul.bf16.gmra.mxu0 %v336
      %v410 = vpop.f32.mrf.mxu0
      %v411 = vadd.f32 %v213, %v410
      %v412 = vpop.f32.mrf.mxu0
      %v413 = vadd.f32 %v213, %v412
      %414 = vmatmul.bf16.gmra.mxu0 %v339
      %v415 = vpop.f32.mrf.mxu0
      %v416 = vadd.f32 %v213, %v415
      %v417 = vpop.f32.mrf.mxu0
      %v418 = vadd.f32 %v213, %v417
      %419 = vmatmul.bf16.gmra.mxu0 %v342
      %v420 = vpop.f32.mrf.mxu0
      %v421 = vadd.f32 %v213, %v420
      %v422 = vpop.f32.mrf.mxu0
      %v423 = vadd.f32 %v213, %v422
      %424 = vmatmul.bf16.gmra.mxu0 %v345
      %v425 = vpop.f32.mrf.mxu0
      %v426 = vadd.f32 %v213, %v425
      %v427 = vpop.f32.mrf.mxu0
      %v428 = vadd.f32 %v213, %v427
      %429 = vmatmul.bf16.gmra.mxu0 %v348
      %v430 = vpop.f32.mrf.mxu0
      %v431 = vadd.f32 %v213, %v430
      %v432 = vpop.f32.mrf.mxu0
      %v433 = vadd.f32 %v213, %v432
      %434 = vmatmul.bf16.gmra.mxu0 %v351
      %v435 = vpop.f32.mrf.mxu0
      %v436 = vadd.f32 %v213, %v435
      %v437 = vpop.f32.mrf.mxu0
      %v438 = vadd.f32 %v213, %v437
      %439 = vmatmul.bf16.gmra.mxu0 %v354
      %v440 = vpop.f32.mrf.mxu0
      %v441 = vadd.f32 %v213, %v440
      %v442 = vpop.f32.mrf.mxu0
      %v443 = vadd.f32 %v213, %v442
      %444 = vdwg.mxu0
      %445 = vst.msk [vmem:[%s172] sm:$0xff] %vm307, %v366
      %446 = vst.msk [vmem:[%s172 + $0x8] sm:$0xff] %vm307, %v368
      %447 = vst.msk [vmem:[%s172 + $0x10] sm:$0xff] %vm307, %v371
      %448 = vst.msk [vmem:[%s172 + $0x18] sm:$0xff] %vm307, %v373
      %449 = vst.msk [vmem:[%s172 + $0x20] sm:$0xff] %vm307, %v376
      %450 = vst.msk [vmem:[%s172 + $0x28] sm:$0xff] %vm307, %v378
      %451 = vst.msk [vmem:[%s172 + $0x30] sm:$0xff] %vm307, %v381
      %452 = vst.msk [vmem:[%s172 + $0x38] sm:$0xff] %vm307, %v383
      %453 = vst.msk [vmem:[%s172 + $0x40] sm:$0xff] %vm307, %v386
      %454 = vst.msk [vmem:[%s172 + $0x48] sm:$0xff] %vm307, %v388
      %455 = vst.msk [vmem:[%s172 + $0x50] sm:$0xff] %vm307, %v391
      %456 = vst.msk [vmem:[%s172 + $0x58] sm:$0xff] %vm307, %v393
      %457 = vst.msk [vmem:[%s172 + $0x60] sm:$0xff] %vm307, %v396
      %458 = vst.msk [vmem:[%s172 + $0x68] sm:$0xff] %vm307, %v398
      %459 = vst.msk [vmem:[%s172 + $0x70] sm:$0xff] %vm307, %v401
      %460 = vst.msk [vmem:[%s172 + $0x78] sm:$0xff] %vm307, %v403
      %461 = vst.msk [vmem:[%s172 + $0x80] sm:$0xff] %vm307, %v406
      %462 = vst.msk [vmem:[%s172 + $0x88] sm:$0xff] %vm307, %v408
      %463 = vst.msk [vmem:[%s172 + $0x90] sm:$0xff] %vm307, %v411
      %464 = vst.msk [vmem:[%s172 + $0x98] sm:$0xff] %vm307, %v413
      %465 = vst.msk [vmem:[%s172 + $0xa0] sm:$0xff] %vm307, %v416
      %466 = vst.msk [vmem:[%s172 + $0xa8] sm:$0xff] %vm307, %v418
      %467 = vst.msk [vmem:[%s172 + $0xb0] sm:$0xff] %vm307, %v421
      %468 = vst.msk [vmem:[%s172 + $0xb8] sm:$0xff] %vm307, %v423
      %469 = vst.msk [vmem:[%s172 + $0xc0] sm:$0xff] %vm307, %v426
      %470 = vst.msk [vmem:[%s172 + $0xc8] sm:$0xff] %vm307, %v428
      %471 = vst.msk [vmem:[%s172 + $0xd0] sm:$0xff] %vm307, %v431
      %472 = vst.msk [vmem:[%s172 + $0xd8] sm:$0xff] %vm307, %v433
      %473 = vst.msk [vmem:[%s172 + $0xe0] sm:$0xff] %vm307, %v436
      %474 = vst.msk [vmem:[%s172 + $0xe8] sm:$0xff] %vm307, %v438
      %475 = vst.msk [vmem:[%s172 + $0xf0] sm:$0xff] %vm307, %v441
      %476 = vst.msk [vmem:[%s172 + $0xf8] sm:$0xff] %vm307, %v443
      %s477 = smul.u32 32, %s14
      %p478 = scmp.lt.s32.totalorder %s477, 63
      %s479 = scalar_select %p478, %s477, 63
      %s480 = smul.addr %s479, 8
      %s481 = scalar_lea.vmem %s3, %s480
      // Predicated region
      $region33: #{tpu_custom_call.1} parent=31 // pred_check
        %p482 = pneg %p100
      $region34: #{tpu_custom_call.1} parent=31 // pred_check_branch
        %484 = sbr.rel (%p482) target = $region36
      $region35: #{tpu_custom_call.1} parent=31 // pred_region
        %s485 = smul.u32 32, %s14
      $region36: #{tpu_custom_call.1} parent=31 // pred_fallthru
        _
    $region32: #{tpu_custom_call.1} parent=5 // pred_fallthru
      _
    %p486 = scmp.le.s32.totalorder 2, %s9
    // Predicated region
    $region37: #{tpu_custom_call.1} parent=5 // pred_check
      %p487 = pneg %p486
    $region38: #{tpu_custom_call.1} parent=5 // pred_check_branch
      %489 = sbr.rel (%p487) target = $region40
    $region39: #{tpu_custom_call.1} parent=5 // pred_region
      %s490 = ssub.s32 %s9, 2
      // Predicated region
      $region41: #{tpu_custom_call.1} parent=39 // pred_check
        %p491 = pneg %p106
      $region42: #{tpu_custom_call.1} parent=39 // pred_check_branch
        %493 = sbr.rel (%p491) target = $region44
      $region43: #{tpu_custom_call.1} parent=39 // pred_region
        %s494 = smul.u32 32, %s15
        %p495 = scmp.lt.s32.totalorder %s494, 63
        %s496 = scalar_select %p495, %s494, 63
        %s497 = smul.addr %s496, 8
        %s498 = scalar_lea.vmem %s3, %s497
      $region44: #{tpu_custom_call.1} parent=39 // pred_fallthru
        _
    $region40: #{tpu_custom_call.1} parent=5 // pred_fallthru
      _
  $region6: #{tpu_custom_call.1} parent=0 // loop_footer
    %s13 = sadd.s32 1, %s9
  $region7: #{tpu_custom_call.1} parent=0 // loop_footer_branch
    %8 = sbr.rel target = $region3
  $region8: #{tpu_custom_call.1} parent=0 // loop_exit
    _

</llo_original>
